<compile_context>
chip_gen: v7x
topology: tpu7x:2x2x1
jax: 0.10.0
libtpu: 0.0.40
codegen_flags: <defaults>
</compile_context>

<pallas_src>
import functools

import jax
import jax.numpy as jnp
from jax.experimental import pallas as pl
from jax.experimental.pallas import tpu as pltpu


# ---------------------------------------------------------------------------
# Kernel
# ---------------------------------------------------------------------------

def _adapter_kernel(x_ref, w1t_ref, w2t_ref, o_ref, *, ratio, one_minus_r):
    """One batch tile: (tb, C) rows, channels on lanes.

    Both matmuls are plain (M,K)x(K,N) contractions against VMEM-resident
    pre-transposed weights; accumulation is f32, blend is done in f32.
    """
    x = x_ref[...]                                                    # (tb, C)
    h = jnp.dot(x, w1t_ref[...], preferred_element_type=jnp.float32)  # (tb, H)
    h = jnp.maximum(h, 0.0).astype(x.dtype)                           # ReLU
    a = jnp.dot(h, w2t_ref[...], preferred_element_type=jnp.float32)  # (tb, C)
    a = jnp.maximum(a, 0.0)                                           # ReLU
    o_ref[...] = (ratio * a + one_minus_r * x.astype(jnp.float32)).astype(o_ref.dtype)


# ---------------------------------------------------------------------------
# Tile sizing / VMEM budgeting
# ---------------------------------------------------------------------------

def _cdiv(a, b):
    return -(-a // b)


def _round_up(n, m):
    return _cdiv(n, m) * m


def _vmem_budget():
    """(tile_budget_bytes, vmem_limit_bytes) derived from chip VMEM capacity."""
    try:
        cap = int(pltpu.get_tpu_info().vmem_capacity_bytes)
    except Exception:
        cap = 64 * 1024 * 1024            # conservative: v7x per-TC physical
    tile_budget = min(24 * 1024 * 1024, cap // 3)          # accounted tile bytes
    vmem_limit = min(40 * 1024 * 1024, (2 * cap) // 3)     # scoped-VMEM request
    return tile_budget, vmem_limit


def _pick_batch_tile(B, C, H, itemsize, budget_bytes, *, multiple=8, min_steps=4):
    """Largest batch tile (multiple of 8) such that
         double-buffered x+out blocks      : 4 * tb * C * itemsize
       + f32 in-kernel intermediates       : tb * (2*C + H) * 4
       + double-buffered resident weights  : 4 * C * H * itemsize
       stays within `budget_bytes`, while keeping >= min_steps grid steps
       (megacore split + DMA/compute overlap) when B is large."""
    per_row = 4 * C * itemsize + (2 * C + H) * 4
    weight_bytes = 4 * C * H * itemsize
    avail = max(budget_bytes - weight_bytes, per_row * multiple)
    cap = max(multiple, avail // per_row)
    tb_steps = _round_up(_cdiv(max(B, 1), min_steps), multiple)
    tb = min(cap, tb_steps, _round_up(max(B, 1), multiple))
    tb = max(multiple, (tb // multiple) * multiple)
    return int(tb)


# ---------------------------------------------------------------------------
# Wrapper
# ---------------------------------------------------------------------------

def adapter_forward(x, w1, w2, residual_ratio=0.2, *, block_b=None):
    """Adapter forward pass.

    x  : (..., C)  activations (Linear acts on the last dim)
    w1 : (H, C)    fc1 weight, PyTorch [out, in] layout, H = C // reduction
    w2 : (C, H)    fc2 weight, PyTorch [out, in] layout
    """
    orig_shape = x.shape
    C = int(orig_shape[-1])
    H = int(w1.shape[0])
    assert w1.shape == (H, C), f"w1 must be (C//r, C), got {w1.shape}"
    assert w2.shape == (C, H), f"w2 must be (C, C//r), got {w2.shape}"

    B = 1
    for d in orig_shape[:-1]:
        B *= int(d)
    x2 = x.reshape(B, C)

    # One-time tiny weight transposes (wrapper side, essentially free) so the
    # kernel never transposes the resident weights per grid step.
    w1t = jnp.asarray(w1).T.astype(x.dtype)   # (C, H)
    w2t = jnp.asarray(w2).T.astype(x.dtype)   # (H, C)

    ratio = float(residual_ratio)
    one_minus_r = float(1.0 - residual_ratio)

    itemsize = jnp.dtype(x.dtype).itemsize
    tile_budget, vmem_limit = _vmem_budget()
    if block_b is not None:
        tb = max(8, (int(block_b) // 8) * 8)
    else:
        tb = _pick_batch_tile(B, C, H, itemsize, tile_budget)

    grid = (_cdiv(max(B, 1), tb),)   # ragged last block handled by Pallas masking

    kernel = functools.partial(_adapter_kernel, ratio=ratio, one_minus_r=one_minus_r)
    out = pl.pallas_call(
        kernel,
        out_shape=jax.ShapeDtypeStruct((B, C), x.dtype),
        grid_spec=pltpu.PrefetchScalarGridSpec(
            num_scalar_prefetch=0,
            grid=grid,
            in_specs=[
                pl.BlockSpec((tb, C), lambda i: (i, 0)),   # x tile (pipelined)
                pl.BlockSpec((C, H), lambda i: (0, 0)),    # W1^T, VMEM resident
                pl.BlockSpec((H, C), lambda i: (0, 0)),    # W2^T, VMEM resident
            ],
            out_specs=pl.BlockSpec((tb, C), lambda i: (i, 0)),
        ),
        compiler_params=pltpu.CompilerParams(
            dimension_semantics=("parallel",),
            vmem_limit_bytes=int(vmem_limit),
        ),
    )(x2, w1t, w2t)

    return out.reshape(orig_shape)


# ---------------------------------------------------------------------------
# Reference + demo
# ---------------------------------------------------------------------------

def adapter_reference(x, w1, w2, residual_ratio=0.2):
    xf = x.astype(jnp.float32)
    a = jnp.maximum(xf @ w1.astype(jnp.float32).T, 0.0)
    a = jnp.maximum(a @ w2.astype(jnp.float32).T, 0.0)
    return residual_ratio * a + (1.0 - residual_ratio) * xf


if __name__ == "__main__":
    key = jax.random.PRNGKey(0)
    k_x, k_w1, k_w2, k_x2, k_w3, k_w4, k_x3 = jax.random.split(key, 7)
    rr = 0.2

    # --- Case 1: small C (< 128, masked stores), ragged batch (B = 200) -----
    c_in, reduction = 32, 4
    hidden = c_in // reduction
    x = jax.random.normal(k_x, (4, 50, c_in), dtype=jnp.float32)
    w1 = jax.random.normal(k_w1, (hidden, c_in), dtype=jnp.float32) * 0.1
    w2 = jax.random.normal(k_w2, (c_in, hidden), dtype=jnp.float32) * 0.1

    out = jax.block_until_ready(adapter_forward(x, w1, w2, rr))
    ref = adapter_reference(x, w1, w2, rr)
    assert out.shape == ref.shape
    assert jnp.allclose(out, ref, atol=1e-4, rtol=1e-4), "mismatch (small-C path)"

    # --- Case 2: lane-aligned C, multi-step grid with ragged last block -----
    c_in2 = 128
    hidden2 = c_in2 // reduction
    x2 = jax.random.normal(k_x2, (96, c_in2), dtype=jnp.float32)
    w3 = jax.random.normal(k_w3, (hidden2, c_in2), dtype=jnp.float32) * 0.05
    w4 = jax.random.normal(k_w4, (c_in2, hidden2), dtype=jnp.float32) * 0.05

    out2 = jax.block_until_ready(adapter_forward(x2, w3, w4, rr, block_b=64))
    ref2 = adapter_reference(x2, w3, w4, rr)
    assert jnp.allclose(out2, ref2, atol=1e-4, rtol=1e-4), "mismatch (large-C path)"

    # --- Case 3: bf16 activations (HBM-traffic halving path) ----------------
    x3 = jax.random.normal(k_x3, (3, 40, c_in2), dtype=jnp.bfloat16)
    out3 = jax.block_until_ready(adapter_forward(x3, w3, w4, rr))
    ref3 = adapter_reference(x3, w3, w4, rr)
    assert out3.dtype == jnp.bfloat16
    assert jnp.allclose(out3.astype(jnp.float32), ref3, atol=3e-2, rtol=3e-2), \
        "mismatch (bf16 path)"

    print("KERNEL_OK")
</pallas_src>

<mosaic_0001>
module attributes {stable_mosaic.version = 11 : i64} {
  func.func @_adapter_kernel(%arg0: i32, %arg1: memref<56x32xf32, #tpu.memory_space<vmem>>, %arg2: memref<32x8xf32, #tpu.memory_space<vmem>>, %arg3: memref<8x32xf32, #tpu.memory_space<vmem>>, %arg4: memref<56x32xf32, #tpu.memory_space<vmem>>) attributes {dimension_semantics = [#tpu.dimension_semantics<parallel>], iteration_bounds = array<i64: 4>, scalar_prefetch = 0 : i64, scratch_operands = 0 : i64, tpu.core_type = #tpu.core_type<tc>, window_params = [{transform_indices = @transform_0, window_bounds = array<i64: 56, 32>}, {pipeline_mode = #tpu.pipeline_mode<synchronous>, transform_indices = @transform_1, window_bounds = array<i64: 32, 8>}, {pipeline_mode = #tpu.pipeline_mode<synchronous>, transform_indices = @transform_2, window_bounds = array<i64: 8, 32>}, {transform_indices = @transform_3, window_bounds = array<i64: 56, 32>}]} {
    %c0 = arith.constant 0 : index
    %c0_0 = arith.constant 0 : index
    %0 = vector.load %arg1[%c0, %c0_0] : memref<56x32xf32, #tpu.memory_space<vmem>>, vector<56x32xf32>
    %c0_1 = arith.constant 0 : index
    %c0_2 = arith.constant 0 : index
    %1 = vector.load %arg2[%c0_1, %c0_2] : memref<32x8xf32, #tpu.memory_space<vmem>>, vector<32x8xf32>
    %cst = arith.constant dense<0.000000e+00> : vector<56x8xf32>
    %2 = tpu.matmul %0, %1, %cst {dimension_numbers = #tpu.dot_dimension_numbers<[1], [0], [0], [1], [0, 0, 1, 1], [], []>} : vector<56x32xf32>, vector<32x8xf32>, vector<56x8xf32> -> vector<56x8xf32>
    %cst_3 = arith.constant 0.000000e+00 : f32
    %3 = vector.broadcast %cst_3 : f32 to vector<56x8xf32>
    %4 = arith.maximumf %2, %3 : vector<56x8xf32>
    %c0_4 = arith.constant 0 : index
    %c0_5 = arith.constant 0 : index
    %5 = vector.load %arg3[%c0_4, %c0_5] : memref<8x32xf32, #tpu.memory_space<vmem>>, vector<8x32xf32>
    %cst_6 = arith.constant dense<0.000000e+00> : vector<56x32xf32>
    %6 = tpu.matmul %4, %5, %cst_6 {dimension_numbers = #tpu.dot_dimension_numbers<[1], [0], [0], [1], [0, 0, 1, 1], [], []>} : vector<56x8xf32>, vector<8x32xf32>, vector<56x32xf32> -> vector<56x32xf32>
    %cst_7 = arith.constant 0.000000e+00 : f32
    %7 = vector.broadcast %cst_7 : f32 to vector<56x32xf32>
    %8 = arith.maximumf %6, %7 : vector<56x32xf32>
    %cst_8 = arith.constant 2.000000e-01 : f32
    %9 = vector.broadcast %cst_8 : f32 to vector<56x32xf32>
    %10 = arith.mulf %9, %8 : vector<56x32xf32>
    %cst_9 = arith.constant 8.000000e-01 : f32
    %11 = vector.broadcast %cst_9 : f32 to vector<56x32xf32>
    %12 = arith.mulf %11, %0 : vector<56x32xf32>
    %13 = arith.addf %10, %12 : vector<56x32xf32>
    %c0_10 = arith.constant 0 : index
    %c0_11 = arith.constant 0 : index
    %14 = vector.load %arg4[%c0_10, %c0_11] : memref<56x32xf32, #tpu.memory_space<vmem>>, vector<56x32xf32>
    tpu.vector_store %arg4[%c0_10, %c0_11], %13 {strides = array<i32>} : memref<56x32xf32, #tpu.memory_space<vmem>>, vector<56x32xf32>,
    return
  }
  func.func @transform_0(%arg0: i32) -> (i32, i32) {
    %c0_i32 = arith.constant 0 : i32
    %c0_i32_0 = arith.constant 0 : i32
    return %arg0, %c0_i32 : i32, i32
  }
  func.func @transform_1(%arg0: i32) -> (i32, i32) {
    %c0_i32 = arith.constant 0 : i32
    %c0_i32_0 = arith.constant 0 : i32
    %c0_i32_1 = arith.constant 0 : i32
    return %c0_i32, %c0_i32_0 : i32, i32
  }
  func.func @transform_2(%arg0: i32) -> (i32, i32) {
    %c0_i32 = arith.constant 0 : i32
    %c0_i32_0 = arith.constant 0 : i32
    %c0_i32_1 = arith.constant 0 : i32
    return %c0_i32, %c0_i32_0 : i32, i32
  }
  func.func @transform_3(%arg0: i32) -> (i32, i32) {
    %c0_i32 = arith.constant 0 : i32
    %c0_i32_0 = arith.constant 0 : i32
    return %arg0, %c0_i32 : i32, i32
  }
}

</mosaic_0001>

<llo_original>
// kernel: tpu_custom_call.1
$region0: #{tpu_custom_call.1}
  #allocation0 [shape = 'u32[]', space=smem, size = 0x4, offset = 0x4, fixed_abs, tag = 'smem constant byte address 0x4 - core index']
  #allocation1 [shape = 'u32[144,128]{1,0:T(1,128)}', space=vmem, size = 0x12000, scoped, tag = 'internal scratch']
  %s0 = inlined_call_operand.vmem [shape: f32[200,32], index: 0, kind: input, shape index: {}]
  %s1 = inlined_call_operand.vmem [shape: f32[32,8], index: 1, kind: input, shape index: {}]
  %s2 = inlined_call_operand.vmem [shape: f32[8,32], index: 2, kind: input, shape index: {}]
  %s3 = inlined_call_operand.vmem [shape: f32[200,32], index: 3, kind: output, shape index: {}]
  %s4 = sld [smem:[#allocation0]]
  $region93: #{tpu_custom_call.1} parent=0
    _
  %s6 = ssub.s32 1, %s4
  %s7 = scalar_select 0, %s6, %s4
  $region1: #{tpu_custom_call.1} parent=0
    #allocation2 [shape = 'u8[57344]{0}', space=vmem, size = 0xe000, scoped, tag = 'output window, operand 0']
    loop: start=0, step=1, limit=6
    $region2: #{tpu_custom_call.1} parent=1 // loop_pre_header
      _
    $region3: #{tpu_custom_call.1} parent=1 // loop_header
      %s9 = sphi 0, %s13
      %p10 = scmp.ge.s32.totalorder %s9, 6
      %s19 = sphi 0, %s21
      %s22 = sphi 0, %s19
      %s23 = sphi 0, %s22
      %s39 = sphi 0, %s23
      %s43 = sphi 0, %s43
      %s45 = sphi 0, %s43
      %s46 = sphi 0, %s45
      %s60 = sphi 0, %s46
      %s64 = sphi 0, %s64
      %s66 = sphi 0, %s64
      %s67 = sphi 0, %s66
      %s81 = sphi 0, %s67
      %s87 = sphi 0, %s89
      %s90 = sphi 0, %s87
      %s91 = sphi 0, %s90
      %s107 = sphi 0, %s91
    $region4: #{tpu_custom_call.1} parent=1 // loop_header_branch
      %12 = sbr.rel (%p10) target = $region8
    $region5: #{tpu_custom_call.1} parent=1 // loop_body
      %s14 = ssub.s32 %s9, 1
      %s15 = ssub.s32 %s9, 2
      %s16 = sadd.s32 %s9, 1
      %s17 = ssub.s32 %s9, %s16
      %p18 = scmp.eq.s32.totalorder %s17, 0
      %s20 = sadd.s32 %s19, 1
      %s21 = scalar_select %p18, %s19, %s20
      %p24 = pneg %p18
      %p25 = scmp.eq.s32.totalorder %s9, 3
      %p26 = por %p24, %p25
      %p27 = scmp.ne.s32.totalorder %s19, %s22
      %p28 = scmp.eq.s32.totalorder %s9, 0
      %p29 = por %p27, %p28
      %p30 = scmp.ne.s32.totalorder %s19, %s22
      %p31 = scmp.eq.s32.totalorder %s14, 3
      %p32 = por %p30, %p31
      %p33 = scmp.ne.s32.totalorder %s22, %s23
      %p34 = scmp.eq.s32.totalorder %s14, 0
      %p35 = por %p33, %p34
      %p36 = scmp.ne.s32.totalorder %s22, %s23
      %p37 = scmp.eq.s32.totalorder %s15, 3
      %p38 = por %p36, %p37
      %p40 = scmp.ne.s32.totalorder %s23, %s39
      %p41 = scmp.eq.s32.totalorder %s15, 0
      %p42 = por %p40, %p41
      %s44 = sadd.s32 %s43, 1
      %p47 = scmp.eq.s32.totalorder %s9, 3
      %p48 = scmp.ne.s32.totalorder %s43, %s45
      %p49 = scmp.eq.s32.totalorder %s9, 0
      %p50 = por %p48, %p49
      %p51 = scmp.ne.s32.totalorder %s43, %s45
      %p52 = scmp.eq.s32.totalorder %s14, 3
      %p53 = por %p51, %p52
      %p54 = scmp.ne.s32.totalorder %s45, %s46
      %p55 = scmp.eq.s32.totalorder %s14, 0
      %p56 = por %p54, %p55
      %p57 = scmp.ne.s32.totalorder %s45, %s46
      %p58 = scmp.eq.s32.totalorder %s15, 3
      %p59 = por %p57, %p58
      %p61 = scmp.ne.s32.totalorder %s46, %s60
      %p62 = scmp.eq.s32.totalorder %s15, 0
      %p63 = por %p61, %p62
      %s65 = sadd.s32 %s64, 1
      %p68 = scmp.eq.s32.totalorder %s9, 3
      %p69 = scmp.ne.s32.totalorder %s64, %s66
      %p70 = scmp.eq.s32.totalorder %s9, 0
      %p71 = por %p69, %p70
      %p72 = scmp.ne.s32.totalorder %s64, %s66
      %p73 = scmp.eq.s32.totalorder %s14, 3
      %p74 = por %p72, %p73
      %p75 = scmp.ne.s32.totalorder %s66, %s67
      %p76 = scmp.eq.s32.totalorder %s14, 0
      %p77 = por %p75, %p76
      %p78 = scmp.ne.s32.totalorder %s66, %s67
      %p79 = scmp.eq.s32.totalorder %s15, 3
      %p80 = por %p78, %p79
      %p82 = scmp.ne.s32.totalorder %s67, %s81
      %p83 = scmp.eq.s32.totalorder %s15, 0
      %p84 = por %p82, %p83
      %s85 = ssub.s32 %s9, %s16
      %p86 = scmp.eq.s32.totalorder %s85, 0
      %s88 = sadd.s32 %s87, 1
      %s89 = scalar_select %p86, %s87, %s88
      %p92 = pneg %p86
      %p93 = scmp.eq.s32.totalorder %s9, 3
      %p94 = por %p92, %p93
      %p95 = scmp.ne.s32.totalorder %s87, %s90
      %p96 = scmp.eq.s32.totalorder %s9, 0
      %p97 = por %p95, %p96
      %p98 = scmp.ne.s32.totalorder %s87, %s90
      %p99 = scmp.eq.s32.totalorder %s14, 3
      %p100 = por %p98, %p99
      %p101 = scmp.ne.s32.totalorder %s90, %s91
      %p102 = scmp.eq.s32.totalorder %s14, 0
      %p103 = por %p101, %p102
      %p104 = scmp.ne.s32.totalorder %s90, %s91
      %p105 = scmp.eq.s32.totalorder %s15, 3
      %p106 = por %p104, %p105
      %p108 = scmp.ne.s32.totalorder %s91, %s107
      %p109 = scmp.eq.s32.totalorder %s15, 0
      %p110 = por %p108, %p109
      %p111 = scmp.le.s32.totalorder 1, %s9
      %p112 = scmp.lt.s32.totalorder %s9, 5
      %p113 = pnand %p111, %p112
      %p114 = pneg %p113
      // Predicated region
      $region9: #{tpu_custom_call.1} parent=5 // pred_check
        _
      $region10: #{tpu_custom_call.1} parent=5 // pred_check_branch
        %116 = sbr.rel (%p113) target = $region12
      $region11: #{tpu_custom_call.1} parent=5 // pred_region
        %s117 = ssub.s32 %s9, 1
        // Predicated region
        $region13: #{tpu_custom_call.1} parent=11 // pred_check
          %p118 = pneg %p56
        $region14: #{tpu_custom_call.1} parent=11 // pred_check_branch
          %120 = sbr.rel (%p118) target = $region16
        $region15: #{tpu_custom_call.1} parent=11 // pred_region
          _
        $region16: #{tpu_custom_call.1} parent=11 // pred_fallthru
          _
        // Predicated region
        $region17: #{tpu_custom_call.1} parent=11 // pred_check
          %p121 = pneg %p77
        $region18: #{tpu_custom_call.1} parent=11 // pred_check_branch
          %123 = sbr.rel (%p121) target = $region20
        $region19: #{tpu_custom_call.1} parent=11 // pred_region
          _
        $region20: #{tpu_custom_call.1} parent=11 // pred_fallthru
          _
      $region12: #{tpu_custom_call.1} parent=5 // pred_fallthru
        _
      %p124 = scmp.lt.s32.totalorder %s9, 4
      // Predicated region
      $region21: #{tpu_custom_call.1} parent=5 // pred_check
        %p125 = pneg %p124
      $region22: #{tpu_custom_call.1} parent=5 // pred_check_branch
        %127 = sbr.rel (%p125) target = $region24
      $region23: #{tpu_custom_call.1} parent=5 // pred_region
        // Predicated region
        $region25: #{tpu_custom_call.1} parent=23 // pred_check
          %p128 = pneg %p29
        $region26: #{tpu_custom_call.1} parent=23 // pred_check_branch
          %130 = sbr.rel (%p128) target = $region28
        $region27: #{tpu_custom_call.1} parent=23 // pred_region
          %s131 = smul.u32 7, %s9
          %s132 = ssub.s32 25, %s131
          %p133 = scmp.lt.s32.totalorder %s132, 7
          %s134 = scalar_select %p133, %s132, 7
          %s135 = smul.u32 128, %s134
          %p136 = scmp.lt.s32.totalorder %s131, 24
          %s137 = scalar_select %p136, %s131, 24
          %s138 = smul.addr %s137, 8
          %s139 = scalar_lea.vmem %s0, %s138
          %s140 = smul.u32 7, %s9
          %s141 = ssub.s32 25, %s140
          %p142 = scmp.lt.s32.totalorder %s141, 7
          %s143 = scalar_select %p142, %s141, 7
          %s144 = smul.u32 128, %s143
        $region28: #{tpu_custom_call.1} parent=23 // pred_fallthru
          _
      $region24: #{tpu_custom_call.1} parent=5 // pred_fallthru
        _
      %p145 = scmp.le.s32.totalorder 1, %s9
      %p146 = scmp.lt.s32.totalorder %s9, 5
      %p147 = pnand %p145, %p146
      %p148 = pneg %p147
      // Predicated region
      $region29: #{tpu_custom_call.1} parent=5 // pred_check
        _
      $region30: #{tpu_custom_call.1} parent=5 // pred_check_branch
        %150 = sbr.rel (%p147) target = $region32
      $region31: #{tpu_custom_call.1} parent=5 // pred_region
        %s151 = ssub.s32 %s9, 1
        %s152 = smul.u32 7, %s14
        %s153 = ssub.s32 25, %s152
        %p154 = scmp.lt.s32.totalorder %s153, 7
        %s155 = scalar_select %p154, %s153, 7
        %s156 = smul.u32 128, %s155
        %p157 = scmp.lt.s32.totalorder %s152, 24
        %s158 = scalar_select %p157, %s152, 24
        %s159 = smul.addr %s158, 8
        %s160 = scalar_lea.vmem %s0, %s159
        %p161 = pneg %p35
        %p162 = pneg %p32
        %p163 = pneg %p56
        %p164 = pneg %p53
        %p165 = pneg %p77
        %p166 = pneg %p74
        %p167 = pneg %p103
        %p168 = pneg %p100
        %s169 = sand.u32 %s90, 1
        %s170 = sand.u32 %s90, 1
        %s171 = smul.addr %s170, 56
        %s172 = scalar_lea.vmem [#allocation2], %s171
        %s173 = smul.u32 7, %s14
        %s174 = ssub.s32 25, %s173
        %p175 = scmp.lt.s32.totalorder %s174, 7
        %s176 = scalar_select %p175, %s174, 7
        %s177 = smul.u32 128, %s176
        %p178 = scmp.lt.s32.totalorder %s173, 24
        %s179 = scalar_select %p178, %s173, 24
        %s180 = smul.addr %s179, 8
        %s181 = scalar_lea.vmem %s0, %s180
        %s182 = smul.u32 7, %s14
        %s183 = ssub.s32 25, %s182
        %p184 = scmp.lt.s32.totalorder %s183, 7
        %s185 = scalar_select %p184, %s183, 7
        %s186 = smul.u32 128, %s185
        %s187 = smul.u32 7, %s14
        %s188 = ssub.s32 25, %s187
        %p189 = scmp.lt.s32.totalorder %s188, 7
        %s190 = scalar_select %p189, %s188, 7
        %s191 = smul.u32 128, %s190
        %v192 = vld [vmem:[%s181] sm:$0xff]
        %v193 = vld [vmem:[%s181 + $0x8] sm:$0xff]
        %v194 = vld [vmem:[%s181 + $0x10] sm:$0xff]
        %v195 = vld [vmem:[%s181 + $0x18] sm:$0xff]
        %v196 = vld [vmem:[%s181 + $0x20] sm:$0xff]
        %v197 = vld [vmem:[%s181 + $0x28] sm:$0xff]
        %v198 = vld [vmem:[%s181 + $0x30] sm:$0xff]
        %v199 = vld [vmem:[%s1] sm:$0xff]
        %v200 = vld [vmem:[%s1 + $0x8] sm:$0xff]
        %v201 = vld [vmem:[%s1 + $0x10] sm:$0xff]
        %v202 = vld [vmem:[%s1 + $0x18] sm:$0xff]
        %vm203 = vcmask 261120
        %v205 = vsel %vm203, %v192, 0
        %v208 = vsel %vm203, %v193, 0
        %v211 = vsel %vm203, %v194, 0
        %v214 = vsel %vm203, %v195, 0
        %v217 = vsel %vm203, %v196, 0
        %v220 = vsel %vm203, %v197, 0
        %v223 = vsel %vm203, %v198, 0
        %225 = vmatprep.subr.mxu0 0.0
        %226 = vmatpush1.msra.mxu0 %v199
        %227 = vmatprep.subr.mxu0 0.0
        %228 = vmatpush1.msra.mxu0 %v200
        %229 = vmatprep.subr.mxu0 0.0
        %230 = vmatpush1.msra.mxu0 %v201
        %231 = vmatprep.subr.mxu0 0.0
        %232 = vmatpush1.msra.mxu0 %v202
        %233 = vmatprep.subr.mxu0 0.0
        %234 = vmatpush1.msra.mxu0 0.0
        %235 = vmatprep.subr.mxu0 0.0
        %236 = vmatpush1.msra.mxu0 0.0
        %237 = vmatprep.subr.mxu0 0.0
        %238 = vmatpush1.msra.mxu0 0.0
        %239 = vmatprep.subr.mxu0 0.0
        %240 = vmatpush1.msra.mxu0 0.0
        %241 = vmatprep.subr.mxu0 0.0
        %242 = vmatpush1.msra.mxu0 0.0
        %243 = vmatprep.subr.mxu0 0.0
        %244 = vmatpush1.msra.mxu0 0.0
        %245 = vmatprep.subr.mxu0 0.0
        %246 = vmatpush1.msra.mxu0 0.0
        %247 = vmatprep.subr.mxu0 0.0
        %248 = vmatpush1.msra.mxu0 0.0
        %249 = vmatprep.subr.mxu0 0.0
        %250 = vmatpush1.msra.mxu0 0.0
        %251 = vmatprep.subr.mxu0 0.0
        %252 = vmatpush1.msra.mxu0 0.0
        %253 = vmatprep.subr.mxu0 0.0
        %254 = vmatpush1.msra.mxu0 0.0
        %255 = vmatprep.subr.mxu0 0.0
        %256 = vmatpush1.msra.mxu0 0.0
        %257 = vmatprep.subr.mxu0 0.0
        %258 = vmatpush1.msra.mxu0 0.0
        %259 = vmatprep.subr.mxu0 0.0
        %260 = vmatpush1.msra.mxu0 0.0
        %261 = vmatprep.subr.mxu0 0.0
        %262 = vmatpush1.msra.mxu0 0.0
        %263 = vmatprep.subr.mxu0 0.0
        %264 = vmatpush1.msra.mxu0 0.0
        %265 = vmatprep.subr.mxu0 0.0
        %266 = vmatpush1.msra.mxu0 0.0
        %267 = vmatprep.subr.mxu0 0.0
        %268 = vmatpush1.msra.mxu0 0.0
        %269 = vmatprep.subr.mxu0 0.0
        %270 = vmatpush1.msra.mxu0 0.0
        %271 = vmatprep.subr.mxu0 0.0
        %272 = vmatpush1.msra.mxu0 0.0
        %273 = vmatprep.subr.mxu0 0.0
        %274 = vmatpush1.msra.mxu0 0.0
        %275 = vmatprep.subr.mxu0 0.0
        %276 = vmatpush1.msra.mxu0 0.0
        %277 = vmatprep.subr.mxu0 0.0
        %278 = vmatpush1.msra.mxu0 0.0
        %279 = vmatprep.subr.mxu0 0.0
        %280 = vmatpush1.msra.mxu0 0.0
        %281 = vmatprep.subr.mxu0 0.0
        %282 = vmatpush1.msra.mxu0 0.0
        %283 = vmatprep.subr.mxu0 0.0
        %284 = vmatpush1.msra.mxu0 0.0
        %285 = vmatprep.subr.mxu0 0.0
        %286 = vmatpush1.msra.mxu0 0.0
        %287 = vmatprep.subr.mxu0 0.0
        %288 = vmatpush1.msra.mxu0 0.0
        %289 = vmatprep.mubr.f32.mxu0 0.0
        %290 = vmatmul.mubr.f32.gmra.mrb[0].mxu0 %v205
        %v291 = vpop.f32.mrb[0].mxu0
        %v292 = vadd.f32 0.0, %v291
        %v293 = vpop.f32.mrb[0].mxu0
        %294 = vmatprep.mubr.f32.mxu0 0.0
        %295 = vmatmul.mubr.f32.gmra.mrb[0].mxu0 %v208
        %v296 = vpop.f32.mrb[0].mxu0
        %v297 = vadd.f32 0.0, %v296
        %v298 = vpop.f32.mrb[0].mxu0
        %299 = vmatprep.mubr.f32.mxu0 0.0
        %300 = vmatmul.mubr.f32.gmra.mrb[0].mxu0 %v211
        %v301 = vpop.f32.mrb[0].mxu0
        %v302 = vadd.f32 0.0, %v301
        %v303 = vpop.f32.mrb[0].mxu0
        %304 = vmatprep.mubr.f32.mxu0 0.0
        %305 = vmatmul.mubr.f32.gmra.mrb[0].mxu0 %v214
        %v306 = vpop.f32.mrb[0].mxu0
        %v307 = vadd.f32 0.0, %v306
        %v308 = vpop.f32.mrb[0].mxu0
        %309 = vmatprep.mubr.f32.mxu0 0.0
        %310 = vmatmul.mubr.f32.gmra.mrb[0].mxu0 %v217
        %v311 = vpop.f32.mrb[0].mxu0
        %v312 = vadd.f32 0.0, %v311
        %v313 = vpop.f32.mrb[0].mxu0
        %314 = vmatprep.mubr.f32.mxu0 0.0
        %315 = vmatmul.mubr.f32.gmra.mrb[0].mxu0 %v220
        %v316 = vpop.f32.mrb[0].mxu0
        %v317 = vadd.f32 0.0, %v316
        %v318 = vpop.f32.mrb[0].mxu0
        %319 = vmatprep.mubr.f32.mxu0 0.0
        %320 = vmatmul.mubr.f32.gmra.mrb[0].mxu0 %v223
        %v321 = vpop.f32.mrb[0].mxu0
        %v322 = vadd.f32 0.0, %v321
        %v323 = vpop.f32.mrb[0].mxu0
        %324 = vdwg.mxu0
        %v325 = vmax.f32 %v292, 0.0
        %v326 = vmax.f32 %v297, 0.0
        %v327 = vmax.f32 %v302, 0.0
        %v328 = vmax.f32 %v307, 0.0
        %v329 = vmax.f32 %v312, 0.0
        %v330 = vmax.f32 %v317, 0.0
        %v331 = vmax.f32 %v322, 0.0
        %v332 = vld [vmem:[%s2] sm:$0xff]
        %vm333 = vcmask 64512
        %v335 = vsel %vm333, %v325, 0
        %v338 = vsel %vm333, %v326, 0
        %v341 = vsel %vm333, %v327, 0
        %v344 = vsel %vm333, %v328, 0
        %v347 = vsel %vm333, %v329, 0
        %v350 = vsel %vm333, %v330, 0
        %v353 = vsel %vm333, %v331, 0
        %355 = vmatprep.subr.mxu0 0.0
        %356 = vmatpush1.msra.mxu0 %v332
        %357 = vmatprep.subr.mxu0 0.0
        %358 = vmatpush1.msra.mxu0 0.0
        %359 = vmatprep.subr.mxu0 0.0
        %360 = vmatpush1.msra.mxu0 0.0
        %361 = vmatprep.subr.mxu0 0.0
        %362 = vmatpush1.msra.mxu0 0.0
        %363 = vmatprep.subr.mxu0 0.0
        %364 = vmatpush1.msra.mxu0 0.0
        %365 = vmatprep.subr.mxu0 0.0
        %366 = vmatpush1.msra.mxu0 0.0
        %367 = vmatprep.subr.mxu0 0.0
        %368 = vmatpush1.msra.mxu0 0.0
        %369 = vmatprep.subr.mxu0 0.0
        %370 = vmatpush1.msra.mxu0 0.0
        %371 = vmatprep.subr.mxu0 0.0
        %372 = vmatpush1.msra.mxu0 0.0
        %373 = vmatprep.subr.mxu0 0.0
        %374 = vmatpush1.msra.mxu0 0.0
        %375 = vmatprep.subr.mxu0 0.0
        %376 = vmatpush1.msra.mxu0 0.0
        %377 = vmatprep.subr.mxu0 0.0
        %378 = vmatpush1.msra.mxu0 0.0
        %379 = vmatprep.subr.mxu0 0.0
        %380 = vmatpush1.msra.mxu0 0.0
        %381 = vmatprep.subr.mxu0 0.0
        %382 = vmatpush1.msra.mxu0 0.0
        %383 = vmatprep.subr.mxu0 0.0
        %384 = vmatpush1.msra.mxu0 0.0
        %385 = vmatprep.subr.mxu0 0.0
        %386 = vmatpush1.msra.mxu0 0.0
        %387 = vmatprep.subr.mxu0 0.0
        %388 = vmatpush1.msra.mxu0 0.0
        %389 = vmatprep.subr.mxu0 0.0
        %390 = vmatpush1.msra.mxu0 0.0
        %391 = vmatprep.subr.mxu0 0.0
        %392 = vmatpush1.msra.mxu0 0.0
        %393 = vmatprep.subr.mxu0 0.0
        %394 = vmatpush1.msra.mxu0 0.0
        %395 = vmatprep.subr.mxu0 0.0
        %396 = vmatpush1.msra.mxu0 0.0
        %397 = vmatprep.subr.mxu0 0.0
        %398 = vmatpush1.msra.mxu0 0.0
        %399 = vmatprep.subr.mxu0 0.0
        %400 = vmatpush1.msra.mxu0 0.0
        %401 = vmatprep.subr.mxu0 0.0
        %402 = vmatpush1.msra.mxu0 0.0
        %403 = vmatprep.subr.mxu0 0.0
        %404 = vmatpush1.msra.mxu0 0.0
        %405 = vmatprep.subr.mxu0 0.0
        %406 = vmatpush1.msra.mxu0 0.0
        %407 = vmatprep.subr.mxu0 0.0
        %408 = vmatpush1.msra.mxu0 0.0
        %409 = vmatprep.subr.mxu0 0.0
        %410 = vmatpush1.msra.mxu0 0.0
        %411 = vmatprep.subr.mxu0 0.0
        %412 = vmatpush1.msra.mxu0 0.0
        %413 = vmatprep.subr.mxu0 0.0
        %414 = vmatpush1.msra.mxu0 0.0
        %415 = vmatprep.subr.mxu0 0.0
        %416 = vmatpush1.msra.mxu0 0.0
        %417 = vmatprep.subr.mxu0 0.0
        %418 = vmatpush1.msra.mxu0 0.0
        %419 = vmatprep.mubr.f32.mxu0 0.0
        %420 = vmatmul.mubr.f32.gmra.mrb[0].mxu0 %v335
        %v421 = vpop.f32.mrb[0].mxu0
        %v422 = vadd.f32 0.0, %v421
        %v423 = vpop.f32.mrb[0].mxu0
        %424 = vmatprep.mubr.f32.mxu0 0.0
        %425 = vmatmul.mubr.f32.gmra.mrb[0].mxu0 %v338
        %v426 = vpop.f32.mrb[0].mxu0
        %v427 = vadd.f32 0.0, %v426
        %v428 = vpop.f32.mrb[0].mxu0
        %429 = vmatprep.mubr.f32.mxu0 0.0
        %430 = vmatmul.mubr.f32.gmra.mrb[0].mxu0 %v341
        %v431 = vpop.f32.mrb[0].mxu0
        %v432 = vadd.f32 0.0, %v431
        %v433 = vpop.f32.mrb[0].mxu0
        %434 = vmatprep.mubr.f32.mxu0 0.0
        %435 = vmatmul.mubr.f32.gmra.mrb[0].mxu0 %v344
        %v436 = vpop.f32.mrb[0].mxu0
        %v437 = vadd.f32 0.0, %v436
        %v438 = vpop.f32.mrb[0].mxu0
        %439 = vmatprep.mubr.f32.mxu0 0.0
        %440 = vmatmul.mubr.f32.gmra.mrb[0].mxu0 %v347
        %v441 = vpop.f32.mrb[0].mxu0
        %v442 = vadd.f32 0.0, %v441
        %v443 = vpop.f32.mrb[0].mxu0
        %444 = vmatprep.mubr.f32.mxu0 0.0
        %445 = vmatmul.mubr.f32.gmra.mrb[0].mxu0 %v350
        %v446 = vpop.f32.mrb[0].mxu0
        %v447 = vadd.f32 0.0, %v446
        %v448 = vpop.f32.mrb[0].mxu0
        %449 = vmatprep.mubr.f32.mxu0 0.0
        %450 = vmatmul.mubr.f32.gmra.mrb[0].mxu0 %v353
        %v451 = vpop.f32.mrb[0].mxu0
        %v452 = vadd.f32 0.0, %v451
        %v453 = vpop.f32.mrb[0].mxu0
        %454 = vdwg.mxu0
        %v455 = vmax.f32 %v422, 0.0
        %v456 = vmax.f32 %v427, 0.0
        %v457 = vmax.f32 %v432, 0.0
        %v458 = vmax.f32 %v437, 0.0
        %v459 = vmax.f32 %v442, 0.0
        %v460 = vmax.f32 %v447, 0.0
        %v461 = vmax.f32 %v452, 0.0
        %v462 = vmul.f32 %v455, 0.2
        %v463 = vmul.f32 %v456, 0.2
        %v464 = vmul.f32 %v457, 0.2
        %v465 = vmul.f32 %v458, 0.2
        %v466 = vmul.f32 %v459, 0.2
        %v467 = vmul.f32 %v460, 0.2
        %v468 = vmul.f32 %v461, 0.2
        %v469 = vmul.f32 %v192, 0.8
        %v470 = vmul.f32 %v193, 0.8
        %v471 = vmul.f32 %v194, 0.8
        %v472 = vmul.f32 %v195, 0.8
        %v473 = vmul.f32 %v196, 0.8
        %v474 = vmul.f32 %v197, 0.8
        %v475 = vmul.f32 %v198, 0.8
        %v476 = vadd.f32 %v462, %v469
        %v477 = vadd.f32 %v463, %v470
        %v478 = vadd.f32 %v464, %v471
        %v479 = vadd.f32 %v465, %v472
        %v480 = vadd.f32 %v466, %v473
        %v481 = vadd.f32 %v467, %v474
        %v482 = vadd.f32 %v468, %v475
        %483 = vst.msk [vmem:[%s172] sm:$0xff] %vm203, %v476
        %484 = vst.msk [vmem:[%s172 + $0x8] sm:$0xff] %vm203, %v477
        %485 = vst.msk [vmem:[%s172 + $0x10] sm:$0xff] %vm203, %v478
        %486 = vst.msk [vmem:[%s172 + $0x18] sm:$0xff] %vm203, %v479
        %487 = vst.msk [vmem:[%s172 + $0x20] sm:$0xff] %vm203, %v480
        %488 = vst.msk [vmem:[%s172 + $0x28] sm:$0xff] %vm203, %v481
        %489 = vst.msk [vmem:[%s172 + $0x30] sm:$0xff] %vm203, %v482
        %s490 = sand.u32 %s90, 1
        %s491 = sand.u32 %s90, 1
        %s492 = smul.addr %s491, 56
        %s493 = scalar_lea.vmem [#allocation2], %s492
        // Predicated region
        $region33: #{tpu_custom_call.1} parent=31 // pred_check
          %p494 = pneg %p100
        $region34: #{tpu_custom_call.1} parent=31 // pred_check_branch
          %496 = sbr.rel (%p494) target = $region36
        $region35: #{tpu_custom_call.1} parent=31 // pred_region
          %s497 = smul.u32 7, %s14
          %s498 = ssub.s32 25, %s497
          %p499 = scmp.lt.s32.totalorder %s498, 7
          %s500 = scalar_select %p499, %s498, 7
          %s501 = smul.u32 128, %s500
          %p502 = scmp.ne.s32.totalorder 0, %s501
          %s503 = smul.addr %s497, 8
          %s504 = scalar_lea.vmem %s3, %s503
          // Predicated region
          $region37: #{tpu_custom_call.1} parent=35 // pred_check
            %p505 = pneg %p502
          $region38: #{tpu_custom_call.1} parent=35 // pred_check_branch
            %507 = sbr.rel (%p505) target = $region40
          $region39: #{tpu_custom_call.1} parent=35 // pred_region
            // Predicated region
            $region41: #{tpu_custom_call.1} parent=39 // pred_check
              _
            $region42: #{tpu_custom_call.1} parent=39 // pred_check_branch
              %509 = sbr.rel (0) target = $region44
            $region43: #{tpu_custom_call.1} parent=39 // pred_region
              // Predicated region
              $region63: #{tpu_custom_call.1} parent=43 // pred_check
                _
              $region64: #{tpu_custom_call.1} parent=43 // pred_check_branch
                %571 = sbr.rel (0) target = $region66
              $region65: #{tpu_custom_call.1} parent=43 // pred_region
                %s572 = sdiv.u32.pop %s500, 7
                %s573 = srem.u32.pop %s500, 7
                // While loop
                $region67: #{tpu_custom_call.1} parent=65 // loop_pre_header
                  _
                $region68: #{tpu_custom_call.1} parent=65 // loop_header
                  %s575 = sphi 0, %s577
                  %p576 = scmp.ge.s32.totalorder %s575, %s572
                  %s580 = sphi 0, %s599
                  %s581 = sphi %s493, %s602
                  %s582 = sphi %s504, %s603
                $region69: #{tpu_custom_call.1} parent=65 // loop_header_branch
                  %579 = sbr.rel (%p576) target = $region73
                $region70: #{tpu_custom_call.1} parent=65 // loop_body
                  %v583 = vld [vmem:[%s581] sm:$0xff]
                  %584 = vst [vmem:[%s582] sm:$0xff] %v583
                  %v585 = vld [vmem:[%s581 + $0x8] sm:$0xff]
                  %586 = vst [vmem:[%s582 + $0x8] sm:$0xff] %v585
                  %v587 = vld [vmem:[%s581 + $0x10] sm:$0xff]
                  %588 = vst [vmem:[%s582 + $0x10] sm:$0xff] %v587
                  %v589 = vld [vmem:[%s581 + $0x18] sm:$0xff]
                  %590 = vst [vmem:[%s582 + $0x18] sm:$0xff] %v589
                  %v591 = vld [vmem:[%s581 + $0x20] sm:$0xff]
                  %592 = vst [vmem:[%s582 + $0x20] sm:$0xff] %v591
                  %v593 = vld [vmem:[%s581 + $0x28] sm:$0xff]
                  %594 = vst [vmem:[%s582 + $0x28] sm:$0xff] %v593
                  %v595 = vld [vmem:[%s581 + $0x30] sm:$0xff]
                  %596 = vst [vmem:[%s582 + $0x30] sm:$0xff] %v595
                  %s597 = sadd.s32 1, %s580
                  %p598 = scmp.ge.s32.totalorder %s597, %s572
                  %s599 = scalar_select %p598, 0, %s597
                  %s600 = smul.u32 %s599, 56
                  %s601 = smul.u32 %s599, 56
                  %s602 = scalar_lea.vmem %s493, %s600 [#allocation2]
                  %s603 = scalar_lea.vmem %s504, %s601
                $region71: #{tpu_custom_call.1} parent=65 // loop_footer
                  %s577 = sadd.s32 %s575, 1
                $region72: #{tpu_custom_call.1} parent=65 // loop_footer_branch
                  %574 = sbr.rel target = $region68
                $region73: #{tpu_custom_call.1} parent=65 // loop_exit
                  _
                %s604 = sdiv.u32.pop %s500, 7
                %s605 = srem.u32.pop %s500, 7
                %s606 = smul.u32 %s604, 7
                %s607 = smul.u32 8, %s606
                %s608 = scalar_lea.vmem %s493, %s607 [#allocation2]
                %s609 = smul.u32 8, %s606
                %s610 = scalar_lea.vmem %s504, %s609
                // While loop
                $region74: #{tpu_custom_call.1} parent=65 // loop_pre_header
                  _
                $region75: #{tpu_custom_call.1} parent=65 // loop_header
                  %s612 = sphi 0, %s614
                  %p613 = scmp.ge.s32.totalorder %s612, %s605
                  %s617 = sphi 0, %s624
                  %s618 = sphi %s608, %s627
                  %s619 = sphi %s610, %s628
                $region76: #{tpu_custom_call.1} parent=65 // loop_header_branch
                  %616 = sbr.rel (%p613) target = $region80
                $region77: #{tpu_custom_call.1} parent=65 // loop_body
                  %v620 = vld [vmem:[%s618] sm:$0xff]
                  %621 = vst [vmem:[%s619] sm:$0xff] %v620
                  %s622 = sadd.s32 1, %s617
                  %p623 = scmp.ge.s32.totalorder %s622, %s605
                  %s624 = scalar_select %p623, 0, %s622
                  %s625 = smul.u32 %s624, 8
                  %s626 = smul.u32 %s624, 8
                  %s627 = scalar_lea.vmem %s608, %s625 [#allocation2]
                  %s628 = scalar_lea.vmem %s610, %s626
                $region78: #{tpu_custom_call.1} parent=65 // loop_footer
                  %s614 = sadd.s32 %s612, 1
                $region79: #{tpu_custom_call.1} parent=65 // loop_footer_branch
                  %611 = sbr.rel target = $region75
                $region80: #{tpu_custom_call.1} parent=65 // loop_exit
                  _
              $region66: #{tpu_custom_call.1} parent=43 // pred_fallthru
                _
              // Predicated region
              $region81: #{tpu_custom_call.1} parent=43 // pred_check
                _
              $region82: #{tpu_custom_call.1} parent=43 // pred_check_branch
                %630 = sbr.rel target = $region84
              $region83: #{tpu_custom_call.1} parent=43 // pred_region
                _
              $region84: #{tpu_custom_call.1} parent=43 // pred_fallthru
                _
            $region44: #{tpu_custom_call.1} parent=39 // pred_fallthru
              _
            // Predicated region
            $region45: #{tpu_custom_call.1} parent=39 // pred_check
              _
            $region46: #{tpu_custom_call.1} parent=39 // pred_check_branch
              %511 = sbr.rel target = $region48
            $region47: #{tpu_custom_call.1} parent=39 // pred_region
              %s513 = sdiv.u32.pop %s500, 7
              %s514 = srem.u32.pop %s500, 7
              // While loop
              $region49: #{tpu_custom_call.1} parent=47 // loop_pre_header
                _
              $region50: #{tpu_custom_call.1} parent=47 // loop_header
                %s516 = sphi 0, %s518
                %p517 = scmp.ge.s32.totalorder %s516, %s513
                %s521 = sphi 0, %s540
                %s522 = sphi %s493, %s543
                %s523 = sphi %s504, %s544
              $region51: #{tpu_custom_call.1} parent=47 // loop_header_branch
                %520 = sbr.rel (%p517) target = $region55
              $region52: #{tpu_custom_call.1} parent=47 // loop_body
                %v524 = vld [vmem:[%s522] sm:$0xff]
                %525 = vst [vmem:[%s523] sm:$0xff] %v524
                %v526 = vld [vmem:[%s522 + $0x8] sm:$0xff]
                %527 = vst [vmem:[%s523 + $0x8] sm:$0xff] %v526
                %v528 = vld [vmem:[%s522 + $0x10] sm:$0xff]
                %529 = vst [vmem:[%s523 + $0x10] sm:$0xff] %v528
                %v530 = vld [vmem:[%s522 + $0x18] sm:$0xff]
                %531 = vst [vmem:[%s523 + $0x18] sm:$0xff] %v530
                %v532 = vld [vmem:[%s522 + $0x20] sm:$0xff]
                %533 = vst [vmem:[%s523 + $0x20] sm:$0xff] %v532
                %v534 = vld [vmem:[%s522 + $0x28] sm:$0xff]
                %535 = vst [vmem:[%s523 + $0x28] sm:$0xff] %v534
                %v536 = vld [vmem:[%s522 + $0x30] sm:$0xff]
                %537 = vst [vmem:[%s523 + $0x30] sm:$0xff] %v536
                %s538 = sadd.s32 1, %s521
                %p539 = scmp.ge.s32.totalorder %s538, %s513
                %s540 = scalar_select %p539, 0, %s538
                %s541 = smul.u32 %s540, 56
                %s542 = smul.u32 %s540, 56
                %s543 = scalar_lea.vmem %s493, %s541 [#allocation2]
                %s544 = scalar_lea.vmem %s504, %s542
              $region53: #{tpu_custom_call.1} parent=47 // loop_footer
                %s518 = sadd.s32 %s516, 1
              $region54: #{tpu_custom_call.1} parent=47 // loop_footer_branch
                %515 = sbr.rel target = $region50
              $region55: #{tpu_custom_call.1} parent=47 // loop_exit
                _
              %s545 = sdiv.u32.pop %s500, 7
              %s546 = srem.u32.pop %s500, 7
              %s547 = smul.u32 %s545, 7
              %s548 = smul.u32 8, %s547
              %s549 = scalar_lea.vmem %s493, %s548 [#allocation2]
              %s550 = smul.u32 8, %s547
              %s551 = scalar_lea.vmem %s504, %s550
              // While loop
              $region56: #{tpu_custom_call.1} parent=47 // loop_pre_header
                _
              $region57: #{tpu_custom_call.1} parent=47 // loop_header
                %s553 = sphi 0, %s555
                %p554 = scmp.ge.s32.totalorder %s553, %s546
                %s558 = sphi 0, %s565
                %s559 = sphi %s549, %s568
                %s560 = sphi %s551, %s569
              $region58: #{tpu_custom_call.1} parent=47 // loop_header_branch
                %557 = sbr.rel (%p554) target = $region62
              $region59: #{tpu_custom_call.1} parent=47 // loop_body
                %v561 = vld [vmem:[%s559] sm:$0xff]
                %562 = vst [vmem:[%s560] sm:$0xff] %v561
                %s563 = sadd.s32 1, %s558
                %p564 = scmp.ge.s32.totalorder %s563, %s546
                %s565 = scalar_select %p564, 0, %s563
                %s566 = smul.u32 %s565, 8
                %s567 = smul.u32 %s565, 8
                %s568 = scalar_lea.vmem %s549, %s566 [#allocation2]
                %s569 = scalar_lea.vmem %s551, %s567
              $region60: #{tpu_custom_call.1} parent=47 // loop_footer
                %s555 = sadd.s32 %s553, 1
              $region61: #{tpu_custom_call.1} parent=47 // loop_footer_branch
                %552 = sbr.rel target = $region57
              $region62: #{tpu_custom_call.1} parent=47 // loop_exit
                _
            $region48: #{tpu_custom_call.1} parent=39 // pred_fallthru
              _
          $region40: #{tpu_custom_call.1} parent=35 // pred_fallthru
            _
          %631 = vnop
        $region36: #{tpu_custom_call.1} parent=31 // pred_fallthru
          _
      $region32: #{tpu_custom_call.1} parent=5 // pred_fallthru
        _
      %p632 = scmp.le.s32.totalorder 2, %s9
      // Predicated region
      $region85: #{tpu_custom_call.1} parent=5 // pred_check
        %p633 = pneg %p632
      $region86: #{tpu_custom_call.1} parent=5 // pred_check_branch
        %635 = sbr.rel (%p633) target = $region88
      $region87: #{tpu_custom_call.1} parent=5 // pred_region
        %s636 = ssub.s32 %s9, 2
        // Predicated region
        $region89: #{tpu_custom_call.1} parent=87 // pred_check
          %p637 = pneg %p106
        $region90: #{tpu_custom_call.1} parent=87 // pred_check_branch
          %639 = sbr.rel (%p637) target = $region92
        $region91: #{tpu_custom_call.1} parent=87 // pred_region
          %s640 = sand.u32 %s91, 1
          %s641 = sand.u32 %s91, 1
          %s642 = smul.addr %s641, 56
          %s643 = scalar_lea.vmem [#allocation2], %s642
        $region92: #{tpu_custom_call.1} parent=87 // pred_fallthru
          _
      $region88: #{tpu_custom_call.1} parent=5 // pred_fallthru
        _
    $region6: #{tpu_custom_call.1} parent=1 // loop_footer
      %s13 = sadd.s32 1, %s9
    $region7: #{tpu_custom_call.1} parent=1 // loop_footer_branch
      %8 = sbr.rel target = $region3
    $region8: #{tpu_custom_call.1} parent=1 // loop_exit
      _

</llo_original>
